<compile_context>
chip_gen: v7x
topology: tpu7x:2x2x1
jax: 0.10.0
libtpu: 0.0.40
codegen_flags: <defaults>
</compile_context>

<pallas_src>
import jax
import jax.numpy as jnp
from jax.experimental import pallas as pl
from jax.experimental.pallas import tpu as pltpu


def _round_up(n, m):
    return ((n + m - 1) // m) * m


def _choose_tile_b(batch: int) -> int:
    """Trace-time batch-tile heuristic (batch is a static Python int)."""
    if batch <= 512:
        # Single tile; 16-row alignment fully packs bf16 sublanes.
        return _round_up(batch, 16)
    # Large batches: big tiles amortize per-step pipeline overhead, capped at
    # 4096 rows (comfortable VMEM on v7x's 64 MiB) and sized so the grid has
    # ~4+ steps for the v7x two-TensorCore "parallel" split.
    tile = _round_up(pl.cdiv(batch, 4), 128)
    return max(256, min(4096, tile))


def _policy_kernel(x_ref, w1_ref, b1_ref, w2_ref, b2_ref, w3_ref, b3_ref,
                   o_ref):
    """One batch tile of the 3-layer MLP.

    Matmuls run bf16 on the MXU with f32 accumulation; bias add, LeakyReLU
    and Tanh stay in f32 on the VPU/EUP. x arrives in f32 straight from HBM
    and is cast to bf16 in-kernel (VPU has plenty of slack).
    """
    x = x_ref[...].astype(jnp.bfloat16)                   # (tile_b, S)

    # layer 1: Linear + LeakyReLU(0.1)
    h = jnp.dot(x, w1_ref[...],
                preferred_element_type=jnp.float32) + b1_ref[...]
    h = jnp.maximum(h, 0.1 * h)

    # layer 2: Linear + LeakyReLU(0.1)
    h = jnp.dot(h.astype(jnp.bfloat16), w2_ref[...],
                preferred_element_type=jnp.float32) + b2_ref[...]
    h = jnp.maximum(h, 0.1 * h)

    # output layer: Linear + Tanh (real `actions` width, no padded columns)
    h = jnp.dot(h.astype(jnp.bfloat16), w3_ref[...],
                preferred_element_type=jnp.float32) + b3_ref[...]
    o_ref[...] = jnp.tanh(h).astype(o_ref.dtype)


def prepare_params(w1, b1, w2, b2, w3, b3):
    """One-time (init / param-update) weight preparation.

    Hidden dims are lane-padded to a multiple of 128 and weights are cast to
    bf16. The state and action dims keep their real sizes (blocks spanning
    the full array dim are legal), so no extra HBM traffic is created.
    Zero padding is exact: padded hidden units get bias 0 -> LeakyReLU(0)=0
    and multiply zero weight rows downstream.
    """
    state_dim, h1 = w1.shape
    h2 = w2.shape[1]
    actions = w3.shape[1]
    h1p, h2p = _round_up(h1, 128), _round_up(h2, 128)

    pad2 = lambda a, r, c: jnp.pad(a, ((0, r - a.shape[0]),
                                       (0, c - a.shape[1])))
    w1p = pad2(w1, state_dim, h1p).astype(jnp.bfloat16)
    w2p = pad2(w2, h1p, h2p).astype(jnp.bfloat16)
    w3p = pad2(w3, h2p, actions).astype(jnp.bfloat16)
    b1p = pad2(b1.reshape(1, -1), 1, h1p).astype(jnp.float32)
    b2p = pad2(b2.reshape(1, -1), 1, h2p).astype(jnp.float32)
    b3p = b3.reshape(1, -1).astype(jnp.float32)
    return w1p, b1p, w2p, b2p, w3p, b3p


@jax.jit
def policy_forward(x, w1, b1, w2, b2, w3, b3):
    """Jitted forward: batch pad -> Pallas MLP -> batch slice (all fused).

    Takes the ORIGINAL f32 state `x` and params already processed by
    `prepare_params`.
    """
    batch, state_dim = x.shape
    h1p = w1.shape[1]
    h2p = w2.shape[1]
    actions = w3.shape[1]

    tile_b = _choose_tile_b(batch)
    bp = _round_up(batch, tile_b)
    x_p = jnp.pad(x.astype(jnp.float32), ((0, bp - batch), (0, 0)))

    grid = (bp // tile_b,)
    tiled = lambda cols: pl.BlockSpec((tile_b, cols), lambda i: (i, 0))
    const = lambda r, c: pl.BlockSpec((r, c), lambda i: (0, 0))

    out = pl.pallas_call(
        _policy_kernel,
        out_shape=jax.ShapeDtypeStruct((bp, actions), jnp.float32),
        grid=grid,
        in_specs=[
            tiled(state_dim),           # x   (batch-tiled, real feature dim)
            const(state_dim, h1p),      # w1  (VMEM-resident across steps)
            const(1, h1p),              # b1
            const(h1p, h2p),            # w2
            const(1, h2p),              # b2
            const(h2p, actions),        # w3  (real action width)
            const(1, actions),          # b3
        ],
        out_specs=tiled(actions),
        compiler_params=pltpu.CompilerParams(
            dimension_semantics=("parallel",),   # megacore / v7x 2-TC split
            vmem_limit_bytes=32 * 1024 * 1024,   # safe on v7x's 64 MiB VMEM
        ),
    )(x_p, w1, b1, w2, b2, w3, b3)
    return out[:batch]


def init_params(key, state_dim, actions, hidden=(32, 32)):
    """PyTorch-Linear-style init: U(-1/sqrt(fan_in), 1/sqrt(fan_in)).

    Weights are returned already transposed to (in, out); biases are (1, out).
    """
    dims = [state_dim, *hidden, actions]
    params = []
    for i in range(len(dims) - 1):
        fan_in, fan_out = dims[i], dims[i + 1]
        key, kw, kb = jax.random.split(key, 3)
        bound = 1.0 / jnp.sqrt(jnp.float32(fan_in))
        w = jax.random.uniform(kw, (fan_in, fan_out), jnp.float32,
                               minval=-bound, maxval=bound)
        b = jax.random.uniform(kb, (1, fan_out), jnp.float32,
                               minval=-bound, maxval=bound)
        params.extend([w, b])
    return params


def reference_forward(x, w1, b1, w2, b2, w3, b3):
    """Pure-JAX reference mimicking the kernel's bf16-matmul / f32-accumulate."""
    # NOTE: bf16 matmuls are a deliberate precision trade vs the f32 PyTorch
    # module; the kernel is HBM-bound so f32 matmuls could be swapped in at
    # negligible cost if bit-level parity were required.
    bf = jnp.bfloat16
    leaky = lambda v: jnp.maximum(v, 0.1 * v)
    dot = lambda a, b: jnp.dot(a.astype(bf), b.astype(bf),
                               preferred_element_type=jnp.float32)
    h = leaky(dot(x, w1) + b1)
    h = leaky(dot(h, w2) + b2)
    return jnp.tanh(dot(h, w3) + b3)


if __name__ == "__main__":
    key = jax.random.PRNGKey(0)
    batch, state_dim, actions = 8, 16, 8
    hidden = (32, 32)

    key, kx = jax.random.split(key)
    x = jax.random.normal(kx, (batch, state_dim), jnp.float32)
    params = init_params(key, state_dim, actions, hidden)

    prepared = prepare_params(*params)        # once, at init / update time
    out = policy_forward(x, *prepared)
    out = jax.block_until_ready(out)

    ref = reference_forward(x, *params)
    assert out.shape == (batch, actions)
    assert jnp.allclose(out, ref, atol=1e-3, rtol=1e-3), "mismatch vs reference"

    print("KERNEL_OK")
</pallas_src>

<mosaic_0001>
module attributes {stable_mosaic.version = 11 : i64} {
  func.func @_policy_kernel(%arg0: i32, %arg1: memref<16x16xf32, #tpu.memory_space<vmem>>, %arg2: memref<16x128xbf16, #tpu.memory_space<vmem>>, %arg3: memref<1x128xf32, #tpu.memory_space<vmem>>, %arg4: memref<128x128xbf16, #tpu.memory_space<vmem>>, %arg5: memref<1x128xf32, #tpu.memory_space<vmem>>, %arg6: memref<128x8xbf16, #tpu.memory_space<vmem>>, %arg7: memref<1x8xf32, #tpu.memory_space<vmem>>, %arg8: memref<16x8xf32, #tpu.memory_space<vmem>>) attributes {dimension_semantics = [#tpu.dimension_semantics<parallel>], iteration_bounds = array<i64: 1>, scalar_prefetch = 0 : i64, scratch_operands = 0 : i64, tpu.core_type = #tpu.core_type<tc>, window_params = [{transform_indices = @transform_0, window_bounds = array<i64: 16, 16>}, {pipeline_mode = #tpu.pipeline_mode<synchronous>, transform_indices = @transform_1, window_bounds = array<i64: 16, 128>}, {pipeline_mode = #tpu.pipeline_mode<synchronous>, transform_indices = @transform_2, window_bounds = array<i64: 1, 128>}, {pipeline_mode = #tpu.pipeline_mode<synchronous>, transform_indices = @transform_3, window_bounds = array<i64: 128, 128>}, {pipeline_mode = #tpu.pipeline_mode<synchronous>, transform_indices = @transform_4, window_bounds = array<i64: 1, 128>}, {pipeline_mode = #tpu.pipeline_mode<synchronous>, transform_indices = @transform_5, window_bounds = array<i64: 128, 8>}, {pipeline_mode = #tpu.pipeline_mode<synchronous>, transform_indices = @transform_6, window_bounds = array<i64: 1, 8>}, {transform_indices = @transform_7, window_bounds = array<i64: 16, 8>}]} {
    %c0 = arith.constant 0 : index
    %c0_0 = arith.constant 0 : index
    %0 = vector.load %arg1[%c0, %c0_0] : memref<16x16xf32, #tpu.memory_space<vmem>>, vector<16x16xf32>
    %1 = arith.truncf %0 : vector<16x16xf32> to vector<16x16xbf16>
    %c0_1 = arith.constant 0 : index
    %c0_2 = arith.constant 0 : index
    %2 = vector.load %arg2[%c0_1, %c0_2] : memref<16x128xbf16, #tpu.memory_space<vmem>>, vector<16x128xbf16>
    %cst = arith.constant dense<0.000000e+00> : vector<16x128xf32>
    %3 = tpu.matmul %1, %2, %cst {dimension_numbers = #tpu.dot_dimension_numbers<[1], [0], [0], [1], [0, 0, 1, 1], [], []>} : vector<16x16xbf16>, vector<16x128xbf16>, vector<16x128xf32> -> vector<16x128xf32>
    %c0_3 = arith.constant 0 : index
    %c0_4 = arith.constant 0 : index
    %4 = vector.load %arg3[%c0_3, %c0_4] : memref<1x128xf32, #tpu.memory_space<vmem>>, vector<1x128xf32>
    %5 = vector.broadcast %4 : vector<1x128xf32> to vector<16x128xf32>
    %6 = arith.addf %3, %5 : vector<16x128xf32>
    %cst_5 = arith.constant 1.000000e-01 : f32
    %7 = vector.broadcast %cst_5 : f32 to vector<16x128xf32>
    %8 = arith.mulf %7, %6 : vector<16x128xf32>
    %9 = arith.maximumf %6, %8 : vector<16x128xf32>
    %10 = arith.truncf %9 : vector<16x128xf32> to vector<16x128xbf16>
    %c0_6 = arith.constant 0 : index
    %c0_7 = arith.constant 0 : index
    %11 = vector.load %arg4[%c0_6, %c0_7] : memref<128x128xbf16, #tpu.memory_space<vmem>>, vector<128x128xbf16>
    %cst_8 = arith.constant dense<0.000000e+00> : vector<16x128xf32>
    %12 = tpu.matmul %10, %11, %cst_8 {dimension_numbers = #tpu.dot_dimension_numbers<[1], [0], [0], [1], [0, 0, 1, 1], [], []>} : vector<16x128xbf16>, vector<128x128xbf16>, vector<16x128xf32> -> vector<16x128xf32>
    %c0_9 = arith.constant 0 : index
    %c0_10 = arith.constant 0 : index
    %13 = vector.load %arg5[%c0_9, %c0_10] : memref<1x128xf32, #tpu.memory_space<vmem>>, vector<1x128xf32>
    %14 = vector.broadcast %13 : vector<1x128xf32> to vector<16x128xf32>
    %15 = arith.addf %12, %14 : vector<16x128xf32>
    %cst_11 = arith.constant 1.000000e-01 : f32
    %16 = vector.broadcast %cst_11 : f32 to vector<16x128xf32>
    %17 = arith.mulf %16, %15 : vector<16x128xf32>
    %18 = arith.maximumf %15, %17 : vector<16x128xf32>
    %19 = arith.truncf %18 : vector<16x128xf32> to vector<16x128xbf16>
    %c0_12 = arith.constant 0 : index
    %c0_13 = arith.constant 0 : index
    %20 = vector.load %arg6[%c0_12, %c0_13] : memref<128x8xbf16, #tpu.memory_space<vmem>>, vector<128x8xbf16>
    %cst_14 = arith.constant dense<0.000000e+00> : vector<16x8xf32>
    %21 = tpu.matmul %19, %20, %cst_14 {dimension_numbers = #tpu.dot_dimension_numbers<[1], [0], [0], [1], [0, 0, 1, 1], [], []>} : vector<16x128xbf16>, vector<128x8xbf16>, vector<16x8xf32> -> vector<16x8xf32>
    %c0_15 = arith.constant 0 : index
    %c0_16 = arith.constant 0 : index
    %22 = vector.load %arg7[%c0_15, %c0_16] : memref<1x8xf32, #tpu.memory_space<vmem>>, vector<1x8xf32>
    %23 = vector.broadcast %22 : vector<1x8xf32> to vector<16x8xf32>
    %24 = arith.addf %21, %23 : vector<16x8xf32>
    %25 = math.tanh %24 : vector<16x8xf32>
    %c0_17 = arith.constant 0 : index
    %c0_18 = arith.constant 0 : index
    %26 = vector.load %arg8[%c0_17, %c0_18] : memref<16x8xf32, #tpu.memory_space<vmem>>, vector<16x8xf32>
    tpu.vector_store %arg8[%c0_17, %c0_18], %25 {strides = array<i32>} : memref<16x8xf32, #tpu.memory_space<vmem>>, vector<16x8xf32>,
    return
  }
  func.func @transform_0(%arg0: i32) -> (i32, i32) {
    %c0_i32 = arith.constant 0 : i32
    %c0_i32_0 = arith.constant 0 : i32
    return %arg0, %c0_i32 : i32, i32
  }
  func.func @transform_1(%arg0: i32) -> (i32, i32) {
    %c0_i32 = arith.constant 0 : i32
    %c0_i32_0 = arith.constant 0 : i32
    %c0_i32_1 = arith.constant 0 : i32
    return %c0_i32, %c0_i32_0 : i32, i32
  }
  func.func @transform_2(%arg0: i32) -> (i32, i32) {
    %c0_i32 = arith.constant 0 : i32
    %c0_i32_0 = arith.constant 0 : i32
    %c0_i32_1 = arith.constant 0 : i32
    return %c0_i32, %c0_i32_0 : i32, i32
  }
  func.func @transform_3(%arg0: i32) -> (i32, i32) {
    %c0_i32 = arith.constant 0 : i32
    %c0_i32_0 = arith.constant 0 : i32
    %c0_i32_1 = arith.constant 0 : i32
    return %c0_i32, %c0_i32_0 : i32, i32
  }
  func.func @transform_4(%arg0: i32) -> (i32, i32) {
    %c0_i32 = arith.constant 0 : i32
    %c0_i32_0 = arith.constant 0 : i32
    %c0_i32_1 = arith.constant 0 : i32
    return %c0_i32, %c0_i32_0 : i32, i32
  }
  func.func @transform_5(%arg0: i32) -> (i32, i32) {
    %c0_i32 = arith.constant 0 : i32
    %c0_i32_0 = arith.constant 0 : i32
    %c0_i32_1 = arith.constant 0 : i32
    return %c0_i32, %c0_i32_0 : i32, i32
  }
  func.func @transform_6(%arg0: i32) -> (i32, i32) {
    %c0_i32 = arith.constant 0 : i32
    %c0_i32_0 = arith.constant 0 : i32
    %c0_i32_1 = arith.constant 0 : i32
    return %c0_i32, %c0_i32_0 : i32, i32
  }
  func.func @transform_7(%arg0: i32) -> (i32, i32) {
    %c0_i32 = arith.constant 0 : i32
    %c0_i32_0 = arith.constant 0 : i32
    return %arg0, %c0_i32 : i32, i32
  }
}

</mosaic_0001>

<llo_original>
// kernel: policy_forward.1
$region0: #{policy_forward.1}
  #allocation0 [shape = 'u32[]', space=smem, size = 0x4, offset = 0x4, fixed_abs, tag = 'smem constant byte address 0x4 - core index']
  #allocation1 [shape = 'u32[144,128]{1,0:T(1,128)}', space=vmem, size = 0x12000, scoped, tag = 'internal scratch']
  %s0 = inlined_call_operand.vmem [shape: f32[16,16], index: 0, kind: input, shape index: {}]
  %s1 = inlined_call_operand.vmem [shape: bf16[16,128], index: 1, kind: input, shape index: {}]
  %s2 = inlined_call_operand.vmem [shape: f32[1,128], index: 2, kind: input, shape index: {}]
  %s3 = inlined_call_operand.vmem [shape: bf16[128,128], index: 3, kind: input, shape index: {}]
  %s4 = inlined_call_operand.vmem [shape: f32[1,128], index: 4, kind: input, shape index: {}]
  %s5 = inlined_call_operand.vmem [shape: bf16[128,8], index: 5, kind: input, shape index: {}]
  %s6 = inlined_call_operand.vmem [shape: f32[1,8], index: 6, kind: input, shape index: {}]
  %s7 = inlined_call_operand.vmem [shape: f32[16,8], index: 7, kind: output, shape index: {}]
  %s8 = sld [smem:[#allocation0]]
  $region38: #{policy_forward.1} parent=0
    _
  %s10 = ssub.s32 1, %s8
  %s11 = scalar_select 0, %s10, %s8
  // Predicated region
  $region2: #{policy_forward.1} parent=0 // pred_check
    _
  $region3: #{policy_forward.1} parent=0 // pred_check_branch
    %13 = sbr.rel (0) target = $region5
  $region4: #{policy_forward.1} parent=0 // pred_region
    _
  $region5: #{policy_forward.1} parent=0 // pred_fallthru
    _
  // Predicated region
  $region6: #{policy_forward.1} parent=0 // pred_check
    _
  $region7: #{policy_forward.1} parent=0 // pred_check_branch
    %15 = sbr.rel (0) target = $region9
  $region8: #{policy_forward.1} parent=0 // pred_region
    _
  $region9: #{policy_forward.1} parent=0 // pred_fallthru
    _
  // Predicated region
  $region10: #{policy_forward.1} parent=0 // pred_check
    _
  $region11: #{policy_forward.1} parent=0 // pred_check_branch
    %17 = sbr.rel (0) target = $region13
  $region12: #{policy_forward.1} parent=0 // pred_region
    _
  $region13: #{policy_forward.1} parent=0 // pred_fallthru
    _
  // Predicated region
  $region14: #{policy_forward.1} parent=0 // pred_check
    _
  $region15: #{policy_forward.1} parent=0 // pred_check_branch
    %19 = sbr.rel (0) target = $region17
  $region16: #{policy_forward.1} parent=0 // pred_region
    _
  $region17: #{policy_forward.1} parent=0 // pred_fallthru
    _
  // Predicated region
  $region18: #{policy_forward.1} parent=0 // pred_check
    _
  $region19: #{policy_forward.1} parent=0 // pred_check_branch
    %21 = sbr.rel (0) target = $region21
  $region20: #{policy_forward.1} parent=0 // pred_region
    _
  $region21: #{policy_forward.1} parent=0 // pred_fallthru
    _
  // Predicated region
  $region22: #{policy_forward.1} parent=0 // pred_check
    _
  $region23: #{policy_forward.1} parent=0 // pred_check_branch
    %23 = sbr.rel (0) target = $region25
  $region24: #{policy_forward.1} parent=0 // pred_region
    _
  $region25: #{policy_forward.1} parent=0 // pred_fallthru
    _
  // Predicated region
  $region26: #{policy_forward.1} parent=0 // pred_check
    _
  $region27: #{policy_forward.1} parent=0 // pred_check_branch
    %25 = sbr.rel (0) target = $region29
  $region28: #{policy_forward.1} parent=0 // pred_region
    _
  $region29: #{policy_forward.1} parent=0 // pred_fallthru
    _
  %v27 = vld [vmem:[%s0] sm:$0xff]
  %v28 = vld [vmem:[%s0 + $0x8] sm:$0xff]
  %v29 = vpack.c.bf16 %v28, %v27
  %v30 = vld [vmem:[%s1] sm:$0xf]
  %v31 = vld [vmem:[%s1 + $0x4] sm:$0xf]
  %v32 = vld [vmem:[%s2] sm:$0x1]
  %v34 = vlaneseq
  %v35 = vshrl.u32 %v34, 7
  %v36 = vsub.s32 0, %v35
  %v37 = vrot.slane %v32, %v36
  %v41 = vunpack.c.l.b16 %v30
  %v42 = vunpack.c.l.b16 %v31
  %v43 = vpack.c.b16 %v42, %v41
  %vm45 = vcmask 130048
  %v47 = vsel %vm45, %v29, 0
  %49 = vmatprep.subr.bf16.mxu0 0
  %50 = vmatpush1.bf16.msra.mxu0 %v43
  %51 = vmatprep.subr.bf16.mxu0 0
  %52 = vmatpush1.bf16.msra.mxu0 0
  %53 = vmatprep.subr.bf16.mxu0 0
  %54 = vmatpush1.bf16.msra.mxu0 0
  %55 = vmatprep.subr.bf16.mxu0 0
  %56 = vmatpush1.bf16.msra.mxu0 0
  %57 = vmatprep.subr.bf16.mxu0 0
  %58 = vmatpush1.bf16.msra.mxu0 0
  %59 = vmatprep.subr.bf16.mxu0 0
  %60 = vmatpush1.bf16.msra.mxu0 0
  %61 = vmatprep.subr.bf16.mxu0 0
  %62 = vmatpush1.bf16.msra.mxu0 0
  %63 = vmatprep.subr.bf16.mxu0 0
  %64 = vmatpush1.bf16.msra.mxu0 0
  %65 = vmatprep.subr.bf16.mxu0 0
  %66 = vmatpush1.bf16.msra.mxu0 0
  %67 = vmatprep.subr.bf16.mxu0 0
  %68 = vmatpush1.bf16.msra.mxu0 0
  %69 = vmatprep.subr.bf16.mxu0 0
  %70 = vmatpush1.bf16.msra.mxu0 0
  %71 = vmatprep.subr.bf16.mxu0 0
  %72 = vmatpush1.bf16.msra.mxu0 0
  %73 = vmatprep.subr.bf16.mxu0 0
  %74 = vmatpush1.bf16.msra.mxu0 0
  %75 = vmatprep.subr.bf16.mxu0 0
  %76 = vmatpush1.bf16.msra.mxu0 0
  %77 = vmatprep.subr.bf16.mxu0 0
  %78 = vmatpush1.bf16.msra.mxu0 0
  %79 = vmatprep.subr.bf16.mxu0 0
  %80 = vmatpush1.bf16.msra.mxu0 0
  %81 = vmatprep.mubr.bf16.mxu0 0
  %82 = vmatmul.mubr.bf16.gmra.mrb[0].mxu0 %v47
  %v83 = vpop.f32.mrb[0].mxu0
  %v84 = vadd.f32 %v37, %v83
  %v85 = vpop.f32.mrb[0].mxu0
  %v86 = vpop.f32.mrb[0].mxu0
  %v87 = vadd.f32 %v37, %v86
  %v88 = vpop.f32.mrb[0].mxu0
  %89 = vdwg.mxu0
  %v90 = vmul.f32 %v84, 0.1
  %v91 = vmul.f32 %v87, 0.1
  %v92 = vmax.f32 %v84, %v90
  %v93 = vmax.f32 %v87, %v91
  %v94 = vpack.c.bf16 %v93, %v92
  %v95 = vld [vmem:[%s3] sm:$0xf]
  %v96 = vld [vmem:[%s3 + $0x4] sm:$0xf]
  %v97 = vld [vmem:[%s3 + $0x8] sm:$0xf]
  %v98 = vld [vmem:[%s3 + $0xc] sm:$0xf]
  %v99 = vld [vmem:[%s3 + $0x10] sm:$0xf]
  %v100 = vld [vmem:[%s3 + $0x14] sm:$0xf]
  %v101 = vld [vmem:[%s3 + $0x18] sm:$0xf]
  %v102 = vld [vmem:[%s3 + $0x1c] sm:$0xf]
  %v103 = vld [vmem:[%s3 + $0x20] sm:$0xf]
  %v104 = vld [vmem:[%s3 + $0x24] sm:$0xf]
  %v105 = vld [vmem:[%s3 + $0x28] sm:$0xf]
  %v106 = vld [vmem:[%s3 + $0x2c] sm:$0xf]
  %v107 = vld [vmem:[%s3 + $0x30] sm:$0xf]
  %v108 = vld [vmem:[%s3 + $0x34] sm:$0xf]
  %v109 = vld [vmem:[%s3 + $0x38] sm:$0xf]
  %v110 = vld [vmem:[%s3 + $0x3c] sm:$0xf]
  %v111 = vld [vmem:[%s4] sm:$0x1]
  %v113 = vlaneseq
  %v114 = vshrl.u32 %v113, 7
  %v115 = vsub.s32 0, %v114
  %v116 = vrot.slane %v111, %v115
  %v134 = vunpack.c.l.b16 %v95
  %v135 = vunpack.c.l.b16 %v96
  %v136 = vunpack.c.l.b16 %v97
  %v137 = vunpack.c.l.b16 %v98
  %v138 = vunpack.c.l.b16 %v99
  %v139 = vunpack.c.l.b16 %v100
  %v140 = vunpack.c.l.b16 %v101
  %v141 = vunpack.c.l.b16 %v102
  %v142 = vunpack.c.l.b16 %v103
  %v143 = vunpack.c.l.b16 %v104
  %v144 = vunpack.c.l.b16 %v105
  %v145 = vunpack.c.l.b16 %v106
  %v146 = vunpack.c.l.b16 %v107
  %v147 = vunpack.c.l.b16 %v108
  %v148 = vunpack.c.l.b16 %v109
  %v149 = vunpack.c.l.b16 %v110
  %v150 = vpack.c.b16 %v135, %v134
  %v151 = vpack.c.b16 %v137, %v136
  %v152 = vpack.c.b16 %v139, %v138
  %v153 = vpack.c.b16 %v141, %v140
  %v154 = vpack.c.b16 %v143, %v142
  %v155 = vpack.c.b16 %v145, %v144
  %v156 = vpack.c.b16 %v147, %v146
  %v157 = vpack.c.b16 %v149, %v148
  %166 = vmatprep.subr.bf16.mxu0 0
  %167 = vmatpush1.bf16.msra.mxu0 %v150
  %168 = vmatprep.subr.bf16.mxu0 0
  %169 = vmatpush1.bf16.msra.mxu0 %v151
  %170 = vmatprep.subr.bf16.mxu0 0
  %171 = vmatpush1.bf16.msra.mxu0 %v152
  %172 = vmatprep.subr.bf16.mxu0 0
  %173 = vmatpush1.bf16.msra.mxu0 %v153
  %174 = vmatprep.subr.bf16.mxu0 0
  %175 = vmatpush1.bf16.msra.mxu0 %v154
  %176 = vmatprep.subr.bf16.mxu0 0
  %177 = vmatpush1.bf16.msra.mxu0 %v155
  %178 = vmatprep.subr.bf16.mxu0 0
  %179 = vmatpush1.bf16.msra.mxu0 %v156
  %180 = vmatprep.subr.bf16.mxu0 0
  %181 = vmatpush1.bf16.msra.mxu0 %v157
  %182 = vmatprep.subr.bf16.mxu0 0
  %183 = vmatpush1.bf16.msra.mxu0 0
  %184 = vmatprep.subr.bf16.mxu0 0
  %185 = vmatpush1.bf16.msra.mxu0 0
  %186 = vmatprep.subr.bf16.mxu0 0
  %187 = vmatpush1.bf16.msra.mxu0 0
  %188 = vmatprep.subr.bf16.mxu0 0
  %189 = vmatpush1.bf16.msra.mxu0 0
  %190 = vmatprep.subr.bf16.mxu0 0
  %191 = vmatpush1.bf16.msra.mxu0 0
  %192 = vmatprep.subr.bf16.mxu0 0
  %193 = vmatpush1.bf16.msra.mxu0 0
  %194 = vmatprep.subr.bf16.mxu0 0
  %195 = vmatpush1.bf16.msra.mxu0 0
  %196 = vmatprep.subr.bf16.mxu0 0
  %197 = vmatpush1.bf16.msra.mxu0 0
  %198 = vmatprep.mubr.bf16.mxu0 0
  %199 = vmatmul.mubr.bf16.gmra.mrb[0].mxu0 %v94
  %v200 = vpop.f32.mrb[0].mxu0
  %v201 = vadd.f32 %v116, %v200
  %v202 = vpop.f32.mrb[0].mxu0
  %v203 = vpop.f32.mrb[0].mxu0
  %v204 = vadd.f32 %v116, %v203
  %v205 = vpop.f32.mrb[0].mxu0
  %206 = vdwg.mxu0
  %v207 = vmul.f32 %v201, 0.1
  %v208 = vmul.f32 %v204, 0.1
  %v209 = vmax.f32 %v201, %v207
  %v210 = vmax.f32 %v204, %v208
  %v211 = vpack.c.bf16 %v210, %v209
  %v212 = vld [vmem:[%s5] sm:$0xf]
  %v213 = vld [vmem:[%s5 + $0x4] sm:$0xf]
  %v214 = vld [vmem:[%s5 + $0x8] sm:$0xf]
  %v215 = vld [vmem:[%s5 + $0xc] sm:$0xf]
  %v216 = vld [vmem:[%s5 + $0x10] sm:$0xf]
  %v217 = vld [vmem:[%s5 + $0x14] sm:$0xf]
  %v218 = vld [vmem:[%s5 + $0x18] sm:$0xf]
  %v219 = vld [vmem:[%s5 + $0x1c] sm:$0xf]
  %v220 = vld [vmem:[%s5 + $0x20] sm:$0xf]
  %v221 = vld [vmem:[%s5 + $0x24] sm:$0xf]
  %v222 = vld [vmem:[%s5 + $0x28] sm:$0xf]
  %v223 = vld [vmem:[%s5 + $0x2c] sm:$0xf]
  %v224 = vld [vmem:[%s5 + $0x30] sm:$0xf]
  %v225 = vld [vmem:[%s5 + $0x34] sm:$0xf]
  %v226 = vld [vmem:[%s5 + $0x38] sm:$0xf]
  %v227 = vld [vmem:[%s5 + $0x3c] sm:$0xf]
  %v228 = vld [vmem:[%s6] sm:$0x1]
  %v230 = vlaneseq
  %v231 = vshrl.u32 %v230, 7
  %v232 = vsub.s32 0, %v231
  %v233 = vrot.slane %v228, %v232
  %v251 = vunpack.c.l.b16 %v212
  %v252 = vunpack.c.l.b16 %v213
  %v253 = vunpack.c.l.b16 %v214
  %v254 = vunpack.c.l.b16 %v215
  %v255 = vunpack.c.l.b16 %v216
  %v256 = vunpack.c.l.b16 %v217
  %v257 = vunpack.c.l.b16 %v218
  %v258 = vunpack.c.l.b16 %v219
  %v259 = vunpack.c.l.b16 %v220
  %v260 = vunpack.c.l.b16 %v221
  %v261 = vunpack.c.l.b16 %v222
  %v262 = vunpack.c.l.b16 %v223
  %v263 = vunpack.c.l.b16 %v224
  %v264 = vunpack.c.l.b16 %v225
  %v265 = vunpack.c.l.b16 %v226
  %v266 = vunpack.c.l.b16 %v227
  %v267 = vpack.c.b16 %v252, %v251
  %v268 = vpack.c.b16 %v254, %v253
  %v269 = vpack.c.b16 %v256, %v255
  %v270 = vpack.c.b16 %v258, %v257
  %v271 = vpack.c.b16 %v260, %v259
  %v272 = vpack.c.b16 %v262, %v261
  %v273 = vpack.c.b16 %v264, %v263
  %v274 = vpack.c.b16 %v266, %v265
  %283 = vmatprep.subr.bf16.mxu0 0
  %284 = vmatpush1.bf16.msra.mxu0 %v267
  %285 = vmatprep.subr.bf16.mxu0 0
  %286 = vmatpush1.bf16.msra.mxu0 %v268
  %287 = vmatprep.subr.bf16.mxu0 0
  %288 = vmatpush1.bf16.msra.mxu0 %v269
  %289 = vmatprep.subr.bf16.mxu0 0
  %290 = vmatpush1.bf16.msra.mxu0 %v270
  %291 = vmatprep.subr.bf16.mxu0 0
  %292 = vmatpush1.bf16.msra.mxu0 %v271
  %293 = vmatprep.subr.bf16.mxu0 0
  %294 = vmatpush1.bf16.msra.mxu0 %v272
  %295 = vmatprep.subr.bf16.mxu0 0
  %296 = vmatpush1.bf16.msra.mxu0 %v273
  %297 = vmatprep.subr.bf16.mxu0 0
  %298 = vmatpush1.bf16.msra.mxu0 %v274
  %299 = vmatprep.subr.bf16.mxu0 0
  %300 = vmatpush1.bf16.msra.mxu0 0
  %301 = vmatprep.subr.bf16.mxu0 0
  %302 = vmatpush1.bf16.msra.mxu0 0
  %303 = vmatprep.subr.bf16.mxu0 0
  %304 = vmatpush1.bf16.msra.mxu0 0
  %305 = vmatprep.subr.bf16.mxu0 0
  %306 = vmatpush1.bf16.msra.mxu0 0
  %307 = vmatprep.subr.bf16.mxu0 0
  %308 = vmatpush1.bf16.msra.mxu0 0
  %309 = vmatprep.subr.bf16.mxu0 0
  %310 = vmatpush1.bf16.msra.mxu0 0
  %311 = vmatprep.subr.bf16.mxu0 0
  %312 = vmatpush1.bf16.msra.mxu0 0
  %313 = vmatprep.subr.bf16.mxu0 0
  %314 = vmatpush1.bf16.msra.mxu0 0
  %315 = vmatprep.mubr.bf16.mxu0 0
  %316 = vmatmul.mubr.bf16.gmra.mrb[0].mxu0 %v211
  %v317 = vpop.f32.mrb[0].mxu0
  %v318 = vadd.f32 %v233, %v317
  %v319 = vpop.f32.mrb[0].mxu0
  %v320 = vpop.f32.mrb[0].mxu0
  %v321 = vadd.f32 %v233, %v320
  %v322 = vpop.f32.mrb[0].mxu0
  %323 = vdwg.mxu0
  %v324 = vtanh.pop %v318
  %v325 = vtanh.pop %v321
  %vm326 = vcmask 64512
  %327 = vst.msk [vmem:[%s7] sm:$0xff] %vm326, %v324
  %328 = vst.msk [vmem:[%s7 + $0x8] sm:$0xff] %vm326, %v325
  // Predicated region
  $region30: #{policy_forward.1} parent=0 // pred_check
    _
  $region31: #{policy_forward.1} parent=0 // pred_check_branch
    %330 = sbr.rel (0) target = $region33
  $region32: #{policy_forward.1} parent=0 // pred_region
    _
  $region33: #{policy_forward.1} parent=0 // pred_fallthru
    _
  // Predicated region
  $region34: #{policy_forward.1} parent=0 // pred_check
    _
  $region35: #{policy_forward.1} parent=0 // pred_check_branch
    %332 = sbr.rel (0) target = $region37
  $region36: #{policy_forward.1} parent=0 // pred_region
    _
  $region37: #{policy_forward.1} parent=0 // pred_fallthru
    _

</llo_original>
